<compile_context>
chip_gen: v5e
topology: v5e:2x2
jax: 0.10.0
libtpu: 0.0.40
codegen_flags: <defaults>
</compile_context>

<pallas_src>
import jax
import jax.numpy as jnp
from jax.experimental import pallas as pl
from jax.experimental.pallas import tpu as pltpu

EPS = 1e-5


# --------------------------------------------------------------------------- #
# Kernels
# --------------------------------------------------------------------------- #
def ffn_resident_kernel(x_ref, w1_ref, w2_ref, p_ref, o_ref):
    """Whole FFN for one token tile; W1/W2 fully resident in VMEM (bf16)."""
    x = x_ref[...]
    x32 = x.astype(jnp.float32)          # f32 copy for residual + LayerNorm
    xb = x.astype(jnp.bfloat16)          # bf16 copy for the MXU

    p = p_ref[...]                       # (4, D) f32: [b1, b2, gamma, beta]
    b1, b2, g, beta = p[0:1, :], p[1:2, :], p[2:3, :], p[3:4, :]

    # Linear 1 + ReLU  (bf16 operands, f32 accumulation on the MXU)
    h = jnp.maximum(
        jnp.dot(xb, w1_ref[...], preferred_element_type=jnp.float32) + b1, 0.0)
    # Linear 2
    y = jnp.dot(h.astype(jnp.bfloat16), w2_ref[...],
                preferred_element_type=jnp.float32) + b2

    # Residual + LayerNorm (biased variance, eps=1e-5), all f32.
    z = x32 + y
    mean = jnp.mean(z, axis=-1, keepdims=True)
    zc = z - mean
    var = jnp.mean(zc * zc, axis=-1, keepdims=True)
    inv = jax.lax.rsqrt(var + EPS)
    o_ref[...] = (zc * inv * g + beta).astype(o_ref.dtype)


def ffn_ktiled_kernel(x_ref, w1_ref, b1_ref, w2_ref, ln_ref, o_ref, acc_ref):
    """FFN with the hidden dim tiled over the (inner, 'arbitrary') grid axis."""
    k = pl.program_id(1)

    @pl.when(k == 0)
    def _():
        acc_ref[...] = jnp.zeros_like(acc_ref)

    xb = x_ref[...].astype(jnp.bfloat16)
    # Hidden slice: relu(x @ W1[:, k*tk:(k+1)*tk] + b1[k])  -> (tm, tk)
    h = jnp.maximum(
        jnp.dot(xb, w1_ref[...], preferred_element_type=jnp.float32) + b1_ref[...],
        0.0)
    # Accumulate its contribution to the second matmul: (tm, tk) @ (tk, D)
    acc_ref[...] += jnp.dot(h.astype(jnp.bfloat16), w2_ref[...],
                            preferred_element_type=jnp.float32)

    @pl.when(k == pl.num_programs(1) - 1)
    def _():
        ln = ln_ref[...]                 # (3, D) f32: [b2, gamma, beta]
        z = x_ref[...].astype(jnp.float32) + acc_ref[...] + ln[0:1, :]
        mean = jnp.mean(z, axis=-1, keepdims=True)
        zc = z - mean
        var = jnp.mean(zc * zc, axis=-1, keepdims=True)
        inv = jax.lax.rsqrt(var + EPS)
        o_ref[...] = (zc * inv * ln[1:2, :] + ln[2:3, :]).astype(o_ref.dtype)


# --------------------------------------------------------------------------- #
# Helpers
# --------------------------------------------------------------------------- #
def _round_up(n, m):
    return ((n + m - 1) // m) * m


def _vmem_capacity_bytes():
    try:
        return int(pltpu.get_tpu_info().vmem_capacity_bytes)
    except Exception:
        return 64 * 1024 * 1024          # conservative (v7x per-TC capacity)


def _tensorcores_per_chip():
    try:
        kind = jax.devices()[0].device_kind.lower()
        return 2 if ("v7" in kind or "7x" in kind) else 1
    except Exception:
        return 1


def _pick_tk(D, tm, wbytes, budget):
    """Largest hidden tile (divisor of D, preferring 256-aligned) fitting VMEM."""
    cands = [c for c in (2048, 1024, 512, 256, 128) if D % c == 0] or [D]
    for tk in cands:
        need = (4 * D * tk * wbytes      # W1 (D,tk) + W2 (tk,D), double-buffered
                + 4 * tm * D * 4         # x / out tiles, double-buffered
                + tm * D * 4             # f32 accumulator scratch
                + tm * tk * 4            # h intermediate
                + 2 * tm * D * 4         # LN epilogue temporaries
                + 16 * D * 4)            # b1 slice + packed LN params
        if need <= budget:
            return tk
    return cands[-1]


def _resident_call(x2, w1c, w2c, packed, *, N, D, tm, vmem_limit, cost, out_dtype,
                   single_buffer_weights):
    # Constant index_map inputs need only one VMEM buffer.
    const_kw = dict(pipeline_mode=pl.Buffered(1)) if single_buffer_weights else {}
    return pl.pallas_call(
        ffn_resident_kernel,
        out_shape=jax.ShapeDtypeStruct((N, D), out_dtype),
        grid_spec=pltpu.PrefetchScalarGridSpec(
            num_scalar_prefetch=0,
            grid=(pl.cdiv(N, tm),),
            in_specs=[
                pl.BlockSpec((tm, D), lambda i: (i, 0)),             # x token tile
                pl.BlockSpec((D, D), lambda i: (0, 0), **const_kw),  # W1 (bf16, resident)
                pl.BlockSpec((D, D), lambda i: (0, 0), **const_kw),  # W2 (bf16, resident)
                pl.BlockSpec((4, D), lambda i: (0, 0), **const_kw),  # [b1,b2,gamma,beta]
            ],
            out_specs=pl.BlockSpec((tm, D), lambda i: (i, 0)),
        ),
        compiler_params=pltpu.CompilerParams(
            dimension_semantics=("parallel",),
            vmem_limit_bytes=vmem_limit),
        cost_estimate=cost,
    )(x2, w1c, w2c, packed)


def _ktiled_call(x2, w1c, b1r, w2c, ln, *, N, D, tm, tk, vmem_limit, cost, out_dtype):
    return pl.pallas_call(
        ffn_ktiled_kernel,
        out_shape=jax.ShapeDtypeStruct((N, D), out_dtype),
        grid_spec=pltpu.PrefetchScalarGridSpec(
            num_scalar_prefetch=0,
            grid=(pl.cdiv(N, tm), D // tk),
            in_specs=[
                pl.BlockSpec((tm, D), lambda i, k: (i, 0)),   # x tile (reused over k)
                pl.BlockSpec((D, tk), lambda i, k: (0, k)),   # W1 column block (streamed)
                pl.BlockSpec((1, tk), lambda i, k: (0, k)),   # b1 block
                pl.BlockSpec((tk, D), lambda i, k: (k, 0)),   # W2 row block (streamed)
                pl.BlockSpec((3, D), lambda i, k: (0, 0)),    # [b2, gamma, beta]
            ],
            out_specs=pl.BlockSpec((tm, D), lambda i, k: (i, 0)),
            scratch_shapes=[pltpu.VMEM((tm, D), jnp.float32)],
        ),
        compiler_params=pltpu.CompilerParams(
            dimension_semantics=("parallel", "arbitrary"),
            vmem_limit_bytes=vmem_limit),
        cost_estimate=cost,
    )(x2, w1c, b1r, w2c, ln)


# --------------------------------------------------------------------------- #
# Public wrapper
# --------------------------------------------------------------------------- #
def feed_forward_net(x, w1, b1, w2, b2, gamma, beta, *, tm=512, tk=None,
                     matmul_dtype=jnp.bfloat16, force_ktiled=False):
    """x: (batch, seq, d). w1, w2: (d, d); b1, b2, gamma, beta: (d,)."""
    B, S, D = x.shape
    N = B * S
    x2 = x.reshape(N, D)                           # metadata-only reshape
    wbytes = jnp.dtype(matmul_dtype).itemsize

    # ---- token tile -------------------------------------------------------
    tm = max(8, min(tm, _round_up(N, 8)))
    if _tensorcores_per_chip() >= 2 and N > 8:
        # Ensure the single "parallel" token axis has >= 2 steps so both
        # TensorCores on a v7x chip get work.
        tm = min(tm, max(8, _round_up(pl.cdiv(N, 2), 8)))

    # ---- VMEM budget / path selection --------------------------------------
    cap = _vmem_capacity_bytes()
    budget = max(cap - (8 << 20), 16 << 20)        # leave headroom below capacity
    resident_need = (2 * D * D * wbytes            # W1 + W2, single-buffered
                     + 4 * tm * D * 4              # x + out tiles, double-buffered
                     + 4 * tm * D * 4              # f32 intermediates (h, y, z, zc)
                     + 8 * D * 4)                  # packed params (sublane padded)
    use_ktiled = force_ktiled or resident_need > budget

    w1c = w1.astype(matmul_dtype)
    w2c = w2.astype(matmul_dtype)

    cost = pl.CostEstimate(
        flops=4 * N * D * D,                       # two (tm,D)x(D,D) matmuls per token
        transcendentals=N,                         # one rsqrt per token row
        bytes_accessed=int(2 * N * D * x.dtype.itemsize
                           + 2 * D * D * wbytes + 4 * D * 4),
    )

    if not use_ktiled:
        packed = jnp.stack([b1, b2, gamma, beta]).astype(jnp.float32)   # (4, D)
        vmem_limit = int(min(max(2 * resident_need + 2 * D * D * wbytes, 32 << 20),
                             budget))
        kwargs = dict(N=N, D=D, tm=tm, vmem_limit=vmem_limit, cost=cost,
                      out_dtype=x.dtype)
        try:
            out2 = _resident_call(x2, w1c, w2c, packed,
                                  single_buffer_weights=True, **kwargs)
        except Exception:
            # pl.Buffered(1) not available in this JAX build: fall back to the
            # default (double-buffered) specs for the constant inputs.
            out2 = _resident_call(x2, w1c, w2c, packed,
                                  single_buffer_weights=False, **kwargs)
        return out2.reshape(B, S, D)

    # ---- K-tiled path: weights streamed over the hidden dim ----------------
    if tk is None or D % tk != 0:
        tk = _pick_tk(D, tm, wbytes, budget)
    b1r = b1.reshape(1, D).astype(jnp.float32)
    ln = jnp.stack([b2, gamma, beta]).astype(jnp.float32)               # (3, D)
    ktiled_need = (4 * D * tk * wbytes + 4 * tm * D * 4 + tm * D * 4
                   + tm * tk * 4 + 2 * tm * D * 4 + 16 * D * 4)
    vmem_limit = int(min(max(2 * ktiled_need, 32 << 20), budget))
    out2 = _ktiled_call(x2, w1c, b1r, w2c, ln, N=N, D=D, tm=tm, tk=tk,
                        vmem_limit=vmem_limit, cost=cost, out_dtype=x.dtype)
    return out2.reshape(B, S, D)


# --------------------------------------------------------------------------- #
# Reference + test
# --------------------------------------------------------------------------- #
def reference(x, w1, b1, w2, b2, gamma, beta):
    h = jnp.maximum(x @ w1 + b1, 0.0)
    y = h @ w2 + b2
    z = x + y
    mean = jnp.mean(z, axis=-1, keepdims=True)
    var = jnp.mean((z - mean) ** 2, axis=-1, keepdims=True)
    return (z - mean) / jnp.sqrt(var + EPS) * gamma + beta


def _make_params(key, D):
    k1, k2, k3, k4 = jax.random.split(key, 4)
    lim = 1.0 / (D ** 0.5)                       # roughly nn.Linear uniform scale
    w1 = jax.random.uniform(k1, (D, D), jnp.float32, -lim, lim)
    b1 = jax.random.uniform(k2, (D,), jnp.float32, -lim, lim)
    w2 = jax.random.uniform(k3, (D, D), jnp.float32, -lim, lim)
    b2 = jax.random.uniform(k4, (D,), jnp.float32, -lim, lim)
    gamma = jnp.ones((D,), jnp.float32)          # LayerNorm default init
    beta = jnp.zeros((D,), jnp.float32)
    return w1, b1, w2, b2, gamma, beta


if __name__ == "__main__":
    key = jax.random.PRNGKey(0)

    # 1) Main case: batch=2, seq=8, model_dim=128 -> fully-resident weights.
    kx, kp, key = jax.random.split(key, 3)
    B, S, D = 2, 8, 128
    x = jax.random.normal(kx, (B, S, D), dtype=jnp.float32)
    params = _make_params(kp, D)
    out = jax.block_until_ready(feed_forward_net(x, *params))
    ref = reference(x, *params)
    assert out.shape == (B, S, D)
    assert jnp.allclose(out, ref, atol=5e-2, rtol=5e-2), "resident path mismatch"

    # 2) Ragged token count (N=21, tm=16) -> Pallas masked partial last block.
    kx, kp, key = jax.random.split(key, 3)
    B, S, D = 3, 7, 128
    x = jax.random.normal(kx, (B, S, D), dtype=jnp.float32)
    params = _make_params(kp, D)
    out = jax.block_until_ready(feed_forward_net(x, *params, tm=16))
    ref = reference(x, *params)
    assert jnp.allclose(out, ref, atol=5e-2, rtol=5e-2), "ragged path mismatch"

    # 3) K-tiled reduction path (forced; hidden dim 256 split into tk=128 tiles).
    kx, kp, key = jax.random.split(key, 3)
    B, S, D = 2, 8, 256
    x = jax.random.normal(kx, (B, S, D), dtype=jnp.float32)
    params = _make_params(kp, D)
    out = jax.block_until_ready(
        feed_forward_net(x, *params, force_ktiled=True, tk=128))
    ref = reference(x, *params)
    assert jnp.allclose(out, ref, atol=5e-2, rtol=5e-2), "k-tiled path mismatch"

    print("KERNEL_OK")
</pallas_src>

<mosaic_0001>
module attributes {stable_mosaic.version = 11 : i64} {
  func.func @ffn_resident_kernel(%arg0: i32, %arg1: memref<16x128xf32, #tpu.memory_space<vmem>>, %arg2: memref<128x128xbf16, #tpu.memory_space<vmem>>, %arg3: memref<128x128xbf16, #tpu.memory_space<vmem>>, %arg4: memref<4x128xf32, #tpu.memory_space<vmem>>, %arg5: memref<16x128xf32, #tpu.memory_space<vmem>>) attributes {dimension_semantics = [#tpu.dimension_semantics<parallel>], iteration_bounds = array<i64: 1>, scalar_prefetch = 0 : i64, scratch_operands = 0 : i64, tpu.core_type = #tpu.core_type<tc>, window_params = [{transform_indices = @transform_0, window_bounds = array<i64: 16, 128>}, {pipeline_mode = #tpu.pipeline_mode<synchronous>, transform_indices = @transform_1, window_bounds = array<i64: 128, 128>}, {pipeline_mode = #tpu.pipeline_mode<synchronous>, transform_indices = @transform_2, window_bounds = array<i64: 128, 128>}, {pipeline_mode = #tpu.pipeline_mode<synchronous>, transform_indices = @transform_3, window_bounds = array<i64: 4, 128>}, {transform_indices = @transform_4, window_bounds = array<i64: 16, 128>}]} {
    %c0 = arith.constant 0 : index
    %c0_0 = arith.constant 0 : index
    %0 = vector.load %arg1[%c0, %c0_0] : memref<16x128xf32, #tpu.memory_space<vmem>>, vector<16x128xf32>
    %1 = arith.truncf %0 : vector<16x128xf32> to vector<16x128xbf16>
    %c0_1 = arith.constant 0 : index
    %c0_2 = arith.constant 0 : index
    %2 = vector.load %arg4[%c0_1, %c0_2] : memref<4x128xf32, #tpu.memory_space<vmem>>, vector<4x128xf32>
    %3 = vector.extract_strided_slice %2 {offsets = [0, 0], sizes = [1, 128], strides = [1, 1]} : vector<4x128xf32> to vector<1x128xf32>
    %4 = vector.extract_strided_slice %2 {offsets = [1, 0], sizes = [1, 128], strides = [1, 1]} : vector<4x128xf32> to vector<1x128xf32>
    %5 = vector.extract_strided_slice %2 {offsets = [2, 0], sizes = [1, 128], strides = [1, 1]} : vector<4x128xf32> to vector<1x128xf32>
    %6 = vector.extract_strided_slice %2 {offsets = [3, 0], sizes = [1, 128], strides = [1, 1]} : vector<4x128xf32> to vector<1x128xf32>
    %c0_3 = arith.constant 0 : index
    %c0_4 = arith.constant 0 : index
    %7 = vector.load %arg2[%c0_3, %c0_4] : memref<128x128xbf16, #tpu.memory_space<vmem>>, vector<128x128xbf16>
    %cst = arith.constant dense<0.000000e+00> : vector<16x128xf32>
    %8 = tpu.matmul %1, %7, %cst {dimension_numbers = #tpu.dot_dimension_numbers<[1], [0], [0], [1], [0, 0, 1, 1], [], []>} : vector<16x128xbf16>, vector<128x128xbf16>, vector<16x128xf32> -> vector<16x128xf32>
    %9 = vector.broadcast %3 : vector<1x128xf32> to vector<16x128xf32>
    %10 = arith.addf %8, %9 : vector<16x128xf32>
    %cst_5 = arith.constant 0.000000e+00 : f32
    %11 = vector.broadcast %cst_5 : f32 to vector<16x128xf32>
    %12 = arith.maximumf %10, %11 : vector<16x128xf32>
    %13 = arith.truncf %12 : vector<16x128xf32> to vector<16x128xbf16>
    %c0_6 = arith.constant 0 : index
    %c0_7 = arith.constant 0 : index
    %14 = vector.load %arg3[%c0_6, %c0_7] : memref<128x128xbf16, #tpu.memory_space<vmem>>, vector<128x128xbf16>
    %cst_8 = arith.constant dense<0.000000e+00> : vector<16x128xf32>
    %15 = tpu.matmul %13, %14, %cst_8 {dimension_numbers = #tpu.dot_dimension_numbers<[1], [0], [0], [1], [0, 0, 1, 1], [], []>} : vector<16x128xbf16>, vector<128x128xbf16>, vector<16x128xf32> -> vector<16x128xf32>
    %16 = vector.broadcast %4 : vector<1x128xf32> to vector<16x128xf32>
    %17 = arith.addf %15, %16 : vector<16x128xf32>
    %18 = arith.addf %0, %17 : vector<16x128xf32>
    %cst_9 = arith.constant dense<0.000000e+00> : vector<16xf32>
    %19 = vector.multi_reduction <add>, %18, %cst_9 [1] : vector<16x128xf32> to vector<16xf32>
    %20 = vector.shape_cast %19 : vector<16xf32> to vector<16x1xf32>
    %cst_10 = arith.constant 1.280000e+02 : f32
    %21 = vector.broadcast %cst_10 : f32 to vector<16x1xf32>
    %22 = arith.divf %20, %21 : vector<16x1xf32>
    %23 = vector.broadcast %22 : vector<16x1xf32> to vector<16x128xf32>
    %24 = arith.subf %18, %23 : vector<16x128xf32>
    %25 = arith.mulf %24, %24 : vector<16x128xf32>
    %cst_11 = arith.constant dense<0.000000e+00> : vector<16xf32>
    %26 = vector.multi_reduction <add>, %25, %cst_11 [1] : vector<16x128xf32> to vector<16xf32>
    %27 = vector.shape_cast %26 : vector<16xf32> to vector<16x1xf32>
    %cst_12 = arith.constant 1.280000e+02 : f32
    %28 = vector.broadcast %cst_12 : f32 to vector<16x1xf32>
    %29 = arith.divf %27, %28 : vector<16x1xf32>
    %cst_13 = arith.constant 9.99999974E-6 : f32
    %30 = vector.broadcast %cst_13 : f32 to vector<16x1xf32>
    %31 = arith.addf %29, %30 : vector<16x1xf32>
    %32 = math.rsqrt %31 : vector<16x1xf32>
    %33 = vector.broadcast %32 : vector<16x1xf32> to vector<16x128xf32>
    %34 = arith.mulf %24, %33 : vector<16x128xf32>
    %35 = vector.broadcast %5 : vector<1x128xf32> to vector<16x128xf32>
    %36 = arith.mulf %34, %35 : vector<16x128xf32>
    %37 = vector.broadcast %6 : vector<1x128xf32> to vector<16x128xf32>
    %38 = arith.addf %36, %37 : vector<16x128xf32>
    %c0_14 = arith.constant 0 : index
    %c0_15 = arith.constant 0 : index
    %39 = vector.load %arg5[%c0_14, %c0_15] : memref<16x128xf32, #tpu.memory_space<vmem>>, vector<16x128xf32>
    tpu.vector_store %arg5[%c0_14, %c0_15], %38 {strides = array<i32>} : memref<16x128xf32, #tpu.memory_space<vmem>>, vector<16x128xf32>,
    return
  }
  func.func @transform_0(%arg0: i32) -> (i32, i32) {
    %c0_i32 = arith.constant 0 : i32
    %c0_i32_0 = arith.constant 0 : i32
    return %arg0, %c0_i32 : i32, i32
  }
  func.func @transform_1(%arg0: i32) -> (i32, i32) {
    %c0_i32 = arith.constant 0 : i32
    %c0_i32_0 = arith.constant 0 : i32
    %c0_i32_1 = arith.constant 0 : i32
    return %c0_i32, %c0_i32_0 : i32, i32
  }
  func.func @transform_2(%arg0: i32) -> (i32, i32) {
    %c0_i32 = arith.constant 0 : i32
    %c0_i32_0 = arith.constant 0 : i32
    %c0_i32_1 = arith.constant 0 : i32
    return %c0_i32, %c0_i32_0 : i32, i32
  }
  func.func @transform_3(%arg0: i32) -> (i32, i32) {
    %c0_i32 = arith.constant 0 : i32
    %c0_i32_0 = arith.constant 0 : i32
    %c0_i32_1 = arith.constant 0 : i32
    return %c0_i32, %c0_i32_0 : i32, i32
  }
  func.func @transform_4(%arg0: i32) -> (i32, i32) {
    %c0_i32 = arith.constant 0 : i32
    %c0_i32_0 = arith.constant 0 : i32
    return %arg0, %c0_i32 : i32, i32
  }
}

module attributes {stable_mosaic.version = 11 : i64} {
  func.func @ffn_resident_kernel(%arg0: i32, %arg1: memref<16x128xf32, #tpu.memory_space<vmem>>, %arg2: memref<128x128xbf16, #tpu.memory_space<vmem>>, %arg3: memref<128x128xbf16, #tpu.memory_space<vmem>>, %arg4: memref<4x128xf32, #tpu.memory_space<vmem>>, %arg5: memref<16x128xf32, #tpu.memory_space<vmem>>) attributes {dimension_semantics = [#tpu.dimension_semantics<parallel>], iteration_bounds = array<i64: 1>, scalar_prefetch = 0 : i64, scratch_operands = 0 : i64, tpu.core_type = #tpu.core_type<tc>, window_params = [{transform_indices = @transform_0, window_bounds = array<i64: 16, 128>}, {pipeline_mode = #tpu.pipeline_mode<synchronous>, transform_indices = @transform_1, window_bounds = array<i64: 128, 128>}, {pipeline_mode = #tpu.pipeline_mode<synchronous>, transform_indices = @transform_2, window_bounds = array<i64: 128, 128>}, {pipeline_mode = #tpu.pipeline_mode<synchronous>, transform_indices = @transform_3, window_bounds = array<i64: 4, 128>}, {transform_indices = @transform_4, window_bounds = array<i64: 16, 128>}]} {
    %c0 = arith.constant 0 : index
    %c0_0 = arith.constant 0 : index
    %0 = vector.load %arg1[%c0, %c0_0] : memref<16x128xf32, #tpu.memory_space<vmem>>, vector<16x128xf32>
    %1 = arith.truncf %0 : vector<16x128xf32> to vector<16x128xbf16>
    %c0_1 = arith.constant 0 : index
    %c0_2 = arith.constant 0 : index
    %2 = vector.load %arg4[%c0_1, %c0_2] : memref<4x128xf32, #tpu.memory_space<vmem>>, vector<4x128xf32>
    %3 = vector.extract_strided_slice %2 {offsets = [0, 0], sizes = [1, 128], strides = [1, 1]} : vector<4x128xf32> to vector<1x128xf32>
    %4 = vector.extract_strided_slice %2 {offsets = [1, 0], sizes = [1, 128], strides = [1, 1]} : vector<4x128xf32> to vector<1x128xf32>
    %5 = vector.extract_strided_slice %2 {offsets = [2, 0], sizes = [1, 128], strides = [1, 1]} : vector<4x128xf32> to vector<1x128xf32>
    %6 = vector.extract_strided_slice %2 {offsets = [3, 0], sizes = [1, 128], strides = [1, 1]} : vector<4x128xf32> to vector<1x128xf32>
    %c0_3 = arith.constant 0 : index
    %c0_4 = arith.constant 0 : index
    %7 = vector.load %arg2[%c0_3, %c0_4] : memref<128x128xbf16, #tpu.memory_space<vmem>>, vector<128x128xbf16>
    %cst = arith.constant dense<0.000000e+00> : vector<16x128xf32>
    %8 = tpu.matmul %1, %7, %cst {dimension_numbers = #tpu.dot_dimension_numbers<[1], [0], [0], [1], [0, 0, 1, 1], [], []>} : vector<16x128xbf16>, vector<128x128xbf16>, vector<16x128xf32> -> vector<16x128xf32>
    %9 = vector.broadcast %3 : vector<1x128xf32> to vector<16x128xf32>
    %10 = arith.addf %8, %9 : vector<16x128xf32>
    %cst_5 = arith.constant 0.000000e+00 : f32
    %11 = vector.broadcast %cst_5 : f32 to vector<16x128xf32>
    %12 = arith.maximumf %10, %11 : vector<16x128xf32>
    %13 = arith.truncf %12 : vector<16x128xf32> to vector<16x128xbf16>
    %c0_6 = arith.constant 0 : index
    %c0_7 = arith.constant 0 : index
    %14 = vector.load %arg3[%c0_6, %c0_7] : memref<128x128xbf16, #tpu.memory_space<vmem>>, vector<128x128xbf16>
    %cst_8 = arith.constant dense<0.000000e+00> : vector<16x128xf32>
    %15 = tpu.matmul %13, %14, %cst_8 {dimension_numbers = #tpu.dot_dimension_numbers<[1], [0], [0], [1], [0, 0, 1, 1], [], []>} : vector<16x128xbf16>, vector<128x128xbf16>, vector<16x128xf32> -> vector<16x128xf32>
    %16 = vector.broadcast %4 : vector<1x128xf32> to vector<16x128xf32>
    %17 = arith.addf %15, %16 : vector<16x128xf32>
    %18 = arith.addf %0, %17 : vector<16x128xf32>
    %cst_9 = arith.constant dense<0.000000e+00> : vector<16xf32>
    %19 = vector.multi_reduction <add>, %18, %cst_9 [1] : vector<16x128xf32> to vector<16xf32>
    %20 = vector.shape_cast %19 : vector<16xf32> to vector<16x1xf32>
    %cst_10 = arith.constant 1.280000e+02 : f32
    %21 = vector.broadcast %cst_10 : f32 to vector<16x1xf32>
    %22 = arith.divf %20, %21 : vector<16x1xf32>
    %23 = vector.broadcast %22 : vector<16x1xf32> to vector<16x128xf32>
    %24 = arith.subf %18, %23 : vector<16x128xf32>
    %25 = arith.mulf %24, %24 : vector<16x128xf32>
    %cst_11 = arith.constant dense<0.000000e+00> : vector<16xf32>
    %26 = vector.multi_reduction <add>, %25, %cst_11 [1] : vector<16x128xf32> to vector<16xf32>
    %27 = vector.shape_cast %26 : vector<16xf32> to vector<16x1xf32>
    %cst_12 = arith.constant 1.280000e+02 : f32
    %28 = vector.broadcast %cst_12 : f32 to vector<16x1xf32>
    %29 = arith.divf %27, %28 : vector<16x1xf32>
    %cst_13 = arith.constant 9.99999974E-6 : f32
    %30 = vector.broadcast %cst_13 : f32 to vector<16x1xf32>
    %31 = arith.addf %29, %30 : vector<16x1xf32>
    %32 = math.rsqrt %31 : vector<16x1xf32>
    %33 = vector.broadcast %32 : vector<16x1xf32> to vector<16x128xf32>
    %34 = arith.mulf %24, %33 : vector<16x128xf32>
    %35 = vector.broadcast %5 : vector<1x128xf32> to vector<16x128xf32>
    %36 = arith.mulf %34, %35 : vector<16x128xf32>
    %37 = vector.broadcast %6 : vector<1x128xf32> to vector<16x128xf32>
    %38 = arith.addf %36, %37 : vector<16x128xf32>
    %c0_14 = arith.constant 0 : index
    %c0_15 = arith.constant 0 : index
    %39 = vector.load %arg5[%c0_14, %c0_15] : memref<16x128xf32, #tpu.memory_space<vmem>>, vector<16x128xf32>
    tpu.vector_store %arg5[%c0_14, %c0_15], %38 {strides = array<i32>} : memref<16x128xf32, #tpu.memory_space<vmem>>, vector<16x128xf32>,
    return
  }
  func.func @transform_0(%arg0: i32) -> (i32, i32) {
    %c0_i32 = arith.constant 0 : i32
    %c0_i32_0 = arith.constant 0 : i32
    return %arg0, %c0_i32 : i32, i32
  }
  func.func @transform_1(%arg0: i32) -> (i32, i32) {
    %c0_i32 = arith.constant 0 : i32
    %c0_i32_0 = arith.constant 0 : i32
    %c0_i32_1 = arith.constant 0 : i32
    return %c0_i32, %c0_i32_0 : i32, i32
  }
  func.func @transform_2(%arg0: i32) -> (i32, i32) {
    %c0_i32 = arith.constant 0 : i32
    %c0_i32_0 = arith.constant 0 : i32
    %c0_i32_1 = arith.constant 0 : i32
    return %c0_i32, %c0_i32_0 : i32, i32
  }
  func.func @transform_3(%arg0: i32) -> (i32, i32) {
    %c0_i32 = arith.constant 0 : i32
    %c0_i32_0 = arith.constant 0 : i32
    %c0_i32_1 = arith.constant 0 : i32
    return %c0_i32, %c0_i32_0 : i32, i32
  }
  func.func @transform_4(%arg0: i32) -> (i32, i32) {
    %c0_i32 = arith.constant 0 : i32
    %c0_i32_0 = arith.constant 0 : i32
    return %arg0, %c0_i32 : i32, i32
  }
}

</mosaic_0001>

<llo_original>
// kernel: tpu_custom_call.1
$region0: #{tpu_custom_call.1}
  #allocation0 [shape = 'u32[]', space=smem, size = 0x4, offset = 0x4, fixed_abs, tag = 'smem constant byte address 0x4 - core index']
  #allocation1 [shape = 'u32[72,128]{1,0:T(1,128)}', space=vmem, size = 0x9000, scoped, tag = 'internal scratch']
  %s0 = inlined_call_operand.hbm [shape: f32[16,128], index: 0, kind: input, shape index: {}]
  %s1 = inlined_call_operand.hbm [shape: bf16[128,128], index: 1, kind: input, shape index: {}]
  %s2 = inlined_call_operand.hbm [shape: bf16[128,128], index: 2, kind: input, shape index: {}]
  %s3 = inlined_call_operand.hbm [shape: f32[4,128], index: 3, kind: input, shape index: {}]
  %s4 = inlined_call_operand.hbm [shape: f32[16,128], index: 4, kind: output, shape index: {}]
  %s5 = sld [smem:[#allocation0]]
  $region42: #{tpu_custom_call.1} parent=0
    _
  %s7 = ssub.s32 1, %s5
  %s8 = scalar_select 0, %s7, %s5
  $region1: #{tpu_custom_call.1} parent=0
    #allocation2 [shape = 'u8[8192]{0}', space=vmem, size = 0x2000, scoped, tag = 'input window, operand 0, single buffered']
    #allocation3 [shape = 's32[1]{0}', space=sflag, size = 0x4, scoped, tag = 'scoped memory for tpu_custom_call.1']
    #allocation4 [shape = 's32[1]{0}', space=sflag, size = 0x4, scoped, tag = 'scoped memory for tpu_custom_call.1']
    #allocation5 [shape = 'u8[32768]{0}', space=vmem, size = 0x8000, scoped, tag = 'input window, operand 1, single buffered']
    #allocation6 [shape = 's32[1]{0}', space=sflag, size = 0x4, scoped, tag = 'scoped memory for tpu_custom_call.1']
    #allocation7 [shape = 'u8[32768]{0}', space=vmem, size = 0x8000, scoped, tag = 'input window, operand 2, single buffered']
    #allocation8 [shape = 'u8[2048]{0}', space=vmem, size = 0x800, scoped, tag = 'input window, operand 3, single buffered']
    #allocation9 [shape = 's32[1]{0}', space=sflag, size = 0x4, scoped, tag = 'scoped memory for tpu_custom_call.1']
    #allocation10 [shape = 'u8[8192]{0}', space=vmem, size = 0x2000, scoped, tag = 'output window, operand 0, single buffered']
    %9 = vsyncpa [#allocation3], 0
    %10 = vsyncpa [#allocation6], 0
    %11 = vsyncpa [#allocation9], 0
    %12 = vsyncpa [#allocation4], 0
    // Predicated region
    $region2: #{tpu_custom_call.1} parent=1 // pred_check
      _
    $region3: #{tpu_custom_call.1} parent=1 // pred_check_branch
      %14 = sbr.rel (0) target = $region5
    $region4: #{tpu_custom_call.1} parent=1 // pred_region
      %16 = vsyncadd [#allocation3], 0
      %s17 = sshll.u32 %s0, 4
      %s18 = int_to_ptr.hbm [resolvable:$true] %s17
      %s19 = sshll.u32 [#allocation2], 4
      %s20 = int_to_ptr.vmem [resolvable:$true] %s19
      %25 = dma.hbm_to_vmem [thread:$0]  %s18, 256, %s20, [#allocation3], 128, 128, 8
    $region5: #{tpu_custom_call.1} parent=1 // pred_fallthru
      _
    // Predicated region
    $region6: #{tpu_custom_call.1} parent=1 // pred_check
      _
    $region7: #{tpu_custom_call.1} parent=1 // pred_check_branch
      %27 = sbr.rel (0) target = $region9
    $region8: #{tpu_custom_call.1} parent=1 // pred_region
      %29 = vsyncadd [#allocation6], 0
      %s30 = sshll.u32 %s1, 4
      %s31 = int_to_ptr.hbm [resolvable:$true] %s30
      %s32 = sshll.u32 [#allocation5], 4
      %s33 = int_to_ptr.vmem [resolvable:$true] %s32
      %38 = dma.hbm_to_vmem [thread:$0]  %s31, 1024, %s33, [#allocation6], 64, 64, 4
    $region9: #{tpu_custom_call.1} parent=1 // pred_fallthru
      _
    // Predicated region
    $region10: #{tpu_custom_call.1} parent=1 // pred_check
      _
    $region11: #{tpu_custom_call.1} parent=1 // pred_check_branch
      %40 = sbr.rel (0) target = $region13
    $region12: #{tpu_custom_call.1} parent=1 // pred_region
      %42 = vsyncadd [#allocation6], 0
      %s43 = sshll.u32 %s2, 4
      %s44 = int_to_ptr.hbm [resolvable:$true] %s43
      %s45 = sshll.u32 [#allocation7], 4
      %s46 = int_to_ptr.vmem [resolvable:$true] %s45
      %51 = dma.hbm_to_vmem [thread:$0]  %s44, 1024, %s46, [#allocation6], 64, 64, 4
    $region13: #{tpu_custom_call.1} parent=1 // pred_fallthru
      _
    // Predicated region
    $region14: #{tpu_custom_call.1} parent=1 // pred_check
      _
    $region15: #{tpu_custom_call.1} parent=1 // pred_check_branch
      %53 = sbr.rel (0) target = $region17
    $region16: #{tpu_custom_call.1} parent=1 // pred_region
      %55 = vsyncadd [#allocation9], 0
      %s57 = sshll.u32 %s3, 4
      %s58 = int_to_ptr.hbm [resolvable:$true] %s57
      %s59 = sshll.u32 [#allocation8], 4
      %s60 = int_to_ptr.vmem [resolvable:$true] %s59
      %62 = dma.hbm_to_vmem [thread:$0]  %s58, 64, %s60, [#allocation9]
    $region17: #{tpu_custom_call.1} parent=1 // pred_fallthru
      _
    // Predicated region
    $region18: #{tpu_custom_call.1} parent=1 // pred_check
      _
    $region19: #{tpu_custom_call.1} parent=1 // pred_check_branch
      %64 = sbr.rel (0) target = $region21
    $region20: #{tpu_custom_call.1} parent=1 // pred_region
      %66 = dma.done [#allocation3], 256
    $region21: #{tpu_custom_call.1} parent=1 // pred_fallthru
      _
    // Predicated region
    $region22: #{tpu_custom_call.1} parent=1 // pred_check
      _
    $region23: #{tpu_custom_call.1} parent=1 // pred_check_branch
      %68 = sbr.rel (0) target = $region25
    $region24: #{tpu_custom_call.1} parent=1 // pred_region
      %70 = dma.done [#allocation6], 1024
    $region25: #{tpu_custom_call.1} parent=1 // pred_fallthru
      _
    // Predicated region
    $region26: #{tpu_custom_call.1} parent=1 // pred_check
      _
    $region27: #{tpu_custom_call.1} parent=1 // pred_check_branch
      %72 = sbr.rel (0) target = $region29
    $region28: #{tpu_custom_call.1} parent=1 // pred_region
      %74 = dma.done [#allocation6], 1024
    $region29: #{tpu_custom_call.1} parent=1 // pred_fallthru
      _
    // Predicated region
    $region30: #{tpu_custom_call.1} parent=1 // pred_check
      _
    $region31: #{tpu_custom_call.1} parent=1 // pred_check_branch
      %76 = sbr.rel (0) target = $region33
    $region32: #{tpu_custom_call.1} parent=1 // pred_region
      %78 = dma.done [#allocation9], 64
    $region33: #{tpu_custom_call.1} parent=1 // pred_fallthru
      _
    %v79 = vld [vmem:[#allocation2] sm:$0xff]
    %v80 = vld [vmem:[#allocation2 + $0x8] sm:$0xff]
    %v81 = vpack.c.bf16 %v80, %v79
    %v82 = vld [vmem:[#allocation8] sm:$0xf]
    %v83 = vld [vmem:[#allocation5] sm:$0xf]
    %v84 = vld [vmem:[#allocation5 + $0x4] sm:$0xf]
    %v85 = vld [vmem:[#allocation5 + $0x8] sm:$0xf]
    %v86 = vld [vmem:[#allocation5 + $0xc] sm:$0xf]
    %v87 = vld [vmem:[#allocation5 + $0x10] sm:$0xf]
    %v88 = vld [vmem:[#allocation5 + $0x14] sm:$0xf]
    %v89 = vld [vmem:[#allocation5 + $0x18] sm:$0xf]
    %v90 = vld [vmem:[#allocation5 + $0x1c] sm:$0xf]
    %v91 = vld [vmem:[#allocation5 + $0x20] sm:$0xf]
    %v92 = vld [vmem:[#allocation5 + $0x24] sm:$0xf]
    %v93 = vld [vmem:[#allocation5 + $0x28] sm:$0xf]
    %v94 = vld [vmem:[#allocation5 + $0x2c] sm:$0xf]
    %v95 = vld [vmem:[#allocation5 + $0x30] sm:$0xf]
    %v96 = vld [vmem:[#allocation5 + $0x34] sm:$0xf]
    %v97 = vld [vmem:[#allocation5 + $0x38] sm:$0xf]
    %v98 = vld [vmem:[#allocation5 + $0x3c] sm:$0xf]
    %v99 = vperm.slane %v82, 0
    %v116 = vunpack.c.l.b16 %v83
    %v117 = vunpack.c.l.b16 %v84
    %v118 = vunpack.c.l.b16 %v85
    %v119 = vunpack.c.l.b16 %v86
    %v120 = vunpack.c.l.b16 %v87
    %v121 = vunpack.c.l.b16 %v88
    %v122 = vunpack.c.l.b16 %v89
    %v123 = vunpack.c.l.b16 %v90
    %v124 = vunpack.c.l.b16 %v91
    %v125 = vunpack.c.l.b16 %v92
    %v126 = vunpack.c.l.b16 %v93
    %v127 = vunpack.c.l.b16 %v94
    %v128 = vunpack.c.l.b16 %v95
    %v129 = vunpack.c.l.b16 %v96
    %v130 = vunpack.c.l.b16 %v97
    %v131 = vunpack.c.l.b16 %v98
    %v132 = vpack.c.b16 %v117, %v116
    %v133 = vpack.c.b16 %v119, %v118
    %v134 = vpack.c.b16 %v121, %v120
    %v135 = vpack.c.b16 %v123, %v122
    %v136 = vpack.c.b16 %v125, %v124
    %v137 = vpack.c.b16 %v127, %v126
    %v138 = vpack.c.b16 %v129, %v128
    %v139 = vpack.c.b16 %v131, %v130
    %148 = vmatpush.bf16.msra.mxu0 %v139
    %149 = vmatpush.bf16.msra.mxu0 %v138
    %150 = vmatpush.bf16.msra.mxu0 %v137
    %151 = vmatpush.bf16.msra.mxu0 %v136
    %152 = vmatpush.bf16.msra.mxu0 %v135
    %153 = vmatpush.bf16.msra.mxu0 %v134
    %154 = vmatpush.bf16.msra.mxu0 %v133
    %155 = vmatpush.bf16.msra.mxu0 %v132
    %156 = vmatmul.bf16.gmra.mxu0 %v81
    %v157 = vpop.f32.mrf.mxu0
    %v158 = vadd.f32 %v99, %v157
    %v159 = vpop.f32.mrf.mxu0
    %v160 = vadd.f32 %v99, %v159
    %161 = vdwg.mxu0
    %v162 = vmax.f32 %v158, 0.0
    %v163 = vmax.f32 %v160, 0.0
    %v164 = vpack.c.bf16 %v163, %v162
    %v165 = vld [vmem:[#allocation7] sm:$0xf]
    %v166 = vld [vmem:[#allocation7 + $0x4] sm:$0xf]
    %v167 = vld [vmem:[#allocation7 + $0x8] sm:$0xf]
    %v168 = vld [vmem:[#allocation7 + $0xc] sm:$0xf]
    %v169 = vld [vmem:[#allocation7 + $0x10] sm:$0xf]
    %v170 = vld [vmem:[#allocation7 + $0x14] sm:$0xf]
    %v171 = vld [vmem:[#allocation7 + $0x18] sm:$0xf]
    %v172 = vld [vmem:[#allocation7 + $0x1c] sm:$0xf]
    %v173 = vld [vmem:[#allocation7 + $0x20] sm:$0xf]
    %v174 = vld [vmem:[#allocation7 + $0x24] sm:$0xf]
    %v175 = vld [vmem:[#allocation7 + $0x28] sm:$0xf]
    %v176 = vld [vmem:[#allocation7 + $0x2c] sm:$0xf]
    %v177 = vld [vmem:[#allocation7 + $0x30] sm:$0xf]
    %v178 = vld [vmem:[#allocation7 + $0x34] sm:$0xf]
    %v179 = vld [vmem:[#allocation7 + $0x38] sm:$0xf]
    %v180 = vld [vmem:[#allocation7 + $0x3c] sm:$0xf]
    %v181 = vperm.slane %v82, 1
    %v198 = vunpack.c.l.b16 %v165
    %v199 = vunpack.c.l.b16 %v166
    %v200 = vunpack.c.l.b16 %v167
    %v201 = vunpack.c.l.b16 %v168
    %v202 = vunpack.c.l.b16 %v169
    %v203 = vunpack.c.l.b16 %v170
    %v204 = vunpack.c.l.b16 %v171
    %v205 = vunpack.c.l.b16 %v172
    %v206 = vunpack.c.l.b16 %v173
    %v207 = vunpack.c.l.b16 %v174
    %v208 = vunpack.c.l.b16 %v175
    %v209 = vunpack.c.l.b16 %v176
    %v210 = vunpack.c.l.b16 %v177
    %v211 = vunpack.c.l.b16 %v178
    %v212 = vunpack.c.l.b16 %v179
    %v213 = vunpack.c.l.b16 %v180
    %v214 = vpack.c.b16 %v199, %v198
    %v215 = vpack.c.b16 %v201, %v200
    %v216 = vpack.c.b16 %v203, %v202
    %v217 = vpack.c.b16 %v205, %v204
    %v218 = vpack.c.b16 %v207, %v206
    %v219 = vpack.c.b16 %v209, %v208
    %v220 = vpack.c.b16 %v211, %v210
    %v221 = vpack.c.b16 %v213, %v212
    %230 = vmatpush.bf16.msra.mxu0 %v221
    %231 = vmatpush.bf16.msra.mxu0 %v220
    %232 = vmatpush.bf16.msra.mxu0 %v219
    %233 = vmatpush.bf16.msra.mxu0 %v218
    %234 = vmatpush.bf16.msra.mxu0 %v217
    %235 = vmatpush.bf16.msra.mxu0 %v216
    %236 = vmatpush.bf16.msra.mxu0 %v215
    %237 = vmatpush.bf16.msra.mxu0 %v214
    %238 = vmatmul.bf16.gmra.mxu0 %v164
    %v239 = vpop.f32.mrf.mxu0
    %v240 = vadd.f32 %v181, %v239
    %v241 = vpop.f32.mrf.mxu0
    %v242 = vadd.f32 %v181, %v241
    %243 = vdwg.mxu0
    %v244 = vadd.f32 %v79, %v240
    %v245 = vadd.f32 %v80, %v242
    %246 = vadd.xlane.f32.xlu0 %v244
    %v247 = vpop.xlane.xlu0 %246
    %248 = vadd.xlane.f32.xlu0 %v245
    %v249 = vpop.xlane.xlu0 %248
    %v250 = vrcp.pop 128.0
    %v251 = vmul.f32 128.0, %v250
    %v252 = vsub.f32 1.0, %v251
    %v253 = vmul.f32 %v250, %v252
    %v254 = vadd.f32 %v250, %v253
    %vm255 = vweird.f32 %v250
    %v256 = vsel %vm255, %v250, %v254
    %v257 = vmul.f32 %v247, %v256
    %v258 = vmul.f32 %v249, %v256
    %v259 = vsub.f32 %v244, %v257
    %v260 = vsub.f32 %v245, %v258
    %v261 = vmul.f32 %v259, %v259
    %v262 = vmul.f32 %v260, %v260
    %263 = vadd.xlane.f32.xlu0 %v261
    %v264 = vpop.xlane.xlu0 %263
    %265 = vadd.xlane.f32.xlu0 %v262
    %v266 = vpop.xlane.xlu0 %265
    %v267 = vmul.f32 %v264, %v256
    %v268 = vmul.f32 %v266, %v256
    %v269 = vadd.f32 %v267, 1e-05
    %v270 = vadd.f32 %v268, 1e-05
    %v271 = vrsqrt.pop %v269
    %v272 = vmul.f32 %v271, %v269
    %v273 = vmul.f32 %v272, %v271
    %v274 = vmul.f32 0.5, %v273
    %v275 = vsub.f32 1.5, %v274
    %v276 = vmul.f32 %v271, %v275
    %vm277 = vweird.f32 %v269
    %vm278 = vweird.f32 %v271
    %vm279 = vmor %vm277, %vm278
    %v280 = vsel %vm279, %v271, %v276
    %v281 = vrsqrt.pop %v270
    %v282 = vmul.f32 %v281, %v270
    %v283 = vmul.f32 %v282, %v281
    %v284 = vmul.f32 0.5, %v283
    %v285 = vsub.f32 1.5, %v284
    %v286 = vmul.f32 %v281, %v285
    %vm287 = vweird.f32 %v270
    %vm288 = vweird.f32 %v281
    %vm289 = vmor %vm287, %vm288
    %v290 = vsel %vm289, %v281, %v286
    %v291 = vmul.f32 %v259, %v280
    %v292 = vmul.f32 %v260, %v290
    %v293 = vperm.slane %v82, 2
    %v294 = vmul.f32 %v291, %v293
    %v295 = vmul.f32 %v292, %v293
    %v296 = vperm.slane %v82, 3
    %v297 = vadd.f32 %v294, %v296
    %v298 = vadd.f32 %v295, %v296
    %299 = vst [vmem:[#allocation10] sm:$0xff] %v297
    %300 = vst [vmem:[#allocation10 + $0x8] sm:$0xff] %v298
    // Predicated region
    $region34: #{tpu_custom_call.1} parent=1 // pred_check
      _
    $region35: #{tpu_custom_call.1} parent=1 // pred_check_branch
      %302 = sbr.rel (0) target = $region37
    $region36: #{tpu_custom_call.1} parent=1 // pred_region
      %304 = vsyncadd [#allocation4], 0
      %s305 = sshll.u32 [#allocation10], 4
      %s306 = int_to_ptr.vmem [resolvable:$true] %s305
      %s307 = sshll.u32 %s4, 4
      %s308 = int_to_ptr.hbm [resolvable:$true] %s307
      %313 = dma.vmem_to_hbm [thread:$0]  %s306, 256, %s308, [#allocation4], 128, 128, 8
    $region37: #{tpu_custom_call.1} parent=1 // pred_fallthru
      _
    // Predicated region
    $region38: #{tpu_custom_call.1} parent=1 // pred_check
      _
    $region39: #{tpu_custom_call.1} parent=1 // pred_check_branch
      %315 = sbr.rel (0) target = $region41
    $region40: #{tpu_custom_call.1} parent=1 // pred_region
      %317 = dma.done [#allocation4], 256
    $region41: #{tpu_custom_call.1} parent=1 // pred_fallthru
      _
    %318 = vsyncpa [#allocation3], 1
    %319 = vsyncpa [#allocation6], 1
    %320 = vsyncpa [#allocation9], 1
    %321 = vsyncpa [#allocation4], 1

// kernel: tpu_custom_call.1
$region0: #{tpu_custom_call.1}
  #allocation0 [shape = 'u32[]', space=smem, size = 0x4, offset = 0x4, fixed_abs, tag = 'smem constant byte address 0x4 - core index']
  #allocation1 [shape = 'u32[72,128]{1,0:T(1,128)}', space=vmem, size = 0x9000, scoped, tag = 'internal scratch']
  %s0 = inlined_call_operand.hbm [shape: f32[16,128], index: 0, kind: input, shape index: {}]
  %s1 = inlined_call_operand.hbm [shape: bf16[128,128], index: 1, kind: input, shape index: {}]
  %s2 = inlined_call_operand.hbm [shape: bf16[128,128], index: 2, kind: input, shape index: {}]
  %s3 = inlined_call_operand.hbm [shape: f32[4,128], index: 3, kind: input, shape index: {}]
  %s4 = inlined_call_operand.hbm [shape: f32[16,128], index: 4, kind: output, shape index: {}]
  %s5 = sld [smem:[#allocation0]]
  $region42: #{tpu_custom_call.1} parent=0
    _
  %s7 = ssub.s32 1, %s5
  %s8 = scalar_select 0, %s7, %s5
  $region1: #{tpu_custom_call.1} parent=0
    #allocation2 [shape = 'u8[8192]{0}', space=vmem, size = 0x2000, scoped, tag = 'input window, operand 0, single buffered']
    #allocation3 [shape = 's32[1]{0}', space=sflag, size = 0x4, scoped, tag = 'scoped memory for tpu_custom_call.1']
    #allocation4 [shape = 's32[1]{0}', space=sflag, size = 0x4, scoped, tag = 'scoped memory for tpu_custom_call.1']
    #allocation5 [shape = 'u8[32768]{0}', space=vmem, size = 0x8000, scoped, tag = 'input window, operand 1, single buffered']
    #allocation6 [shape = 's32[1]{0}', space=sflag, size = 0x4, scoped, tag = 'scoped memory for tpu_custom_call.1']
    #allocation7 [shape = 'u8[32768]{0}', space=vmem, size = 0x8000, scoped, tag = 'input window, operand 2, single buffered']
    #allocation8 [shape = 'u8[2048]{0}', space=vmem, size = 0x800, scoped, tag = 'input window, operand 3, single buffered']
    #allocation9 [shape = 's32[1]{0}', space=sflag, size = 0x4, scoped, tag = 'scoped memory for tpu_custom_call.1']
    #allocation10 [shape = 'u8[8192]{0}', space=vmem, size = 0x2000, scoped, tag = 'output window, operand 0, single buffered']
    %9 = vsyncpa [#allocation3], 0
    %10 = vsyncpa [#allocation6], 0
    %11 = vsyncpa [#allocation9], 0
    %12 = vsyncpa [#allocation4], 0
    // Predicated region
    $region2: #{tpu_custom_call.1} parent=1 // pred_check
      _
    $region3: #{tpu_custom_call.1} parent=1 // pred_check_branch
      %14 = sbr.rel (0) target = $region5
    $region4: #{tpu_custom_call.1} parent=1 // pred_region
      %16 = vsyncadd [#allocation3], 0
      %s17 = sshll.u32 %s0, 4
      %s18 = int_to_ptr.hbm [resolvable:$true] %s17
      %s19 = sshll.u32 [#allocation2], 4
      %s20 = int_to_ptr.vmem [resolvable:$true] %s19
      %25 = dma.hbm_to_vmem [thread:$0]  %s18, 256, %s20, [#allocation3], 128, 128, 8
    $region5: #{tpu_custom_call.1} parent=1 // pred_fallthru
      _
    // Predicated region
    $region6: #{tpu_custom_call.1} parent=1 // pred_check
      _
    $region7: #{tpu_custom_call.1} parent=1 // pred_check_branch
      %27 = sbr.rel (0) target = $region9
    $region8: #{tpu_custom_call.1} parent=1 // pred_region
      %29 = vsyncadd [#allocation6], 0
      %s30 = sshll.u32 %s1, 4
      %s31 = int_to_ptr.hbm [resolvable:$true] %s30
      %s32 = sshll.u32 [#allocation5], 4
      %s33 = int_to_ptr.vmem [resolvable:$true] %s32
      %38 = dma.hbm_to_vmem [thread:$0]  %s31, 1024, %s33, [#allocation6], 64, 64, 4
    $region9: #{tpu_custom_call.1} parent=1 // pred_fallthru
      _
    // Predicated region
    $region10: #{tpu_custom_call.1} parent=1 // pred_check
      _
    $region11: #{tpu_custom_call.1} parent=1 // pred_check_branch
      %40 = sbr.rel (0) target = $region13
    $region12: #{tpu_custom_call.1} parent=1 // pred_region
      %42 = vsyncadd [#allocation6], 0
      %s43 = sshll.u32 %s2, 4
      %s44 = int_to_ptr.hbm [resolvable:$true] %s43
      %s45 = sshll.u32 [#allocation7], 4
      %s46 = int_to_ptr.vmem [resolvable:$true] %s45
      %51 = dma.hbm_to_vmem [thread:$0]  %s44, 1024, %s46, [#allocation6], 64, 64, 4
    $region13: #{tpu_custom_call.1} parent=1 // pred_fallthru
      _
    // Predicated region
    $region14: #{tpu_custom_call.1} parent=1 // pred_check
      _
    $region15: #{tpu_custom_call.1} parent=1 // pred_check_branch
      %53 = sbr.rel (0) target = $region17
    $region16: #{tpu_custom_call.1} parent=1 // pred_region
      %55 = vsyncadd [#allocation9], 0
      %s57 = sshll.u32 %s3, 4
      %s58 = int_to_ptr.hbm [resolvable:$true] %s57
      %s59 = sshll.u32 [#allocation8], 4
      %s60 = int_to_ptr.vmem [resolvable:$true] %s59
      %62 = dma.hbm_to_vmem [thread:$0]  %s58, 64, %s60, [#allocation9]
    $region17: #{tpu_custom_call.1} parent=1 // pred_fallthru
      _
    // Predicated region
    $region18: #{tpu_custom_call.1} parent=1 // pred_check
      _
    $region19: #{tpu_custom_call.1} parent=1 // pred_check_branch
      %64 = sbr.rel (0) target = $region21
    $region20: #{tpu_custom_call.1} parent=1 // pred_region
      %66 = dma.done [#allocation3], 256
    $region21: #{tpu_custom_call.1} parent=1 // pred_fallthru
      _
    // Predicated region
    $region22: #{tpu_custom_call.1} parent=1 // pred_check
      _
    $region23: #{tpu_custom_call.1} parent=1 // pred_check_branch
      %68 = sbr.rel (0) target = $region25
    $region24: #{tpu_custom_call.1} parent=1 // pred_region
      %70 = dma.done [#allocation6], 1024
    $region25: #{tpu_custom_call.1} parent=1 // pred_fallthru
      _
    // Predicated region
    $region26: #{tpu_custom_call.1} parent=1 // pred_check
      _
    $region27: #{tpu_custom_call.1} parent=1 // pred_check_branch
      %72 = sbr.rel (0) target = $region29
    $region28: #{tpu_custom_call.1} parent=1 // pred_region
      %74 = dma.done [#allocation6], 1024
    $region29: #{tpu_custom_call.1} parent=1 // pred_fallthru
      _
    // Predicated region
    $region30: #{tpu_custom_call.1} parent=1 // pred_check
      _
    $region31: #{tpu_custom_call.1} parent=1 // pred_check_branch
      %76 = sbr.rel (0) target = $region33
    $region32: #{tpu_custom_call.1} parent=1 // pred_region
      %78 = dma.done [#allocation9], 64
    $region33: #{tpu_custom_call.1} parent=1 // pred_fallthru
      _
    %v79 = vld [vmem:[#allocation2] sm:$0xff]
    %v80 = vld [vmem:[#allocation2 + $0x8] sm:$0xff]
    %v81 = vpack.c.bf16 %v80, %v79
    %v82 = vld [vmem:[#allocation8] sm:$0xf]
    %v83 = vld [vmem:[#allocation5] sm:$0xf]
    %v84 = vld [vmem:[#allocation5 + $0x4] sm:$0xf]
    %v85 = vld [vmem:[#allocation5 + $0x8] sm:$0xf]
    %v86 = vld [vmem:[#allocation5 + $0xc] sm:$0xf]
    %v87 = vld [vmem:[#allocation5 + $0x10] sm:$0xf]
    %v88 = vld [vmem:[#allocation5 + $0x14] sm:$0xf]
    %v89 = vld [vmem:[#allocation5 + $0x18] sm:$0xf]
    %v90 = vld [vmem:[#allocation5 + $0x1c] sm:$0xf]
    %v91 = vld [vmem:[#allocation5 + $0x20] sm:$0xf]
    %v92 = vld [vmem:[#allocation5 + $0x24] sm:$0xf]
    %v93 = vld [vmem:[#allocation5 + $0x28] sm:$0xf]
    %v94 = vld [vmem:[#allocation5 + $0x2c] sm:$0xf]
    %v95 = vld [vmem:[#allocation5 + $0x30] sm:$0xf]
    %v96 = vld [vmem:[#allocation5 + $0x34] sm:$0xf]
    %v97 = vld [vmem:[#allocation5 + $0x38] sm:$0xf]
    %v98 = vld [vmem:[#allocation5 + $0x3c] sm:$0xf]
    %v99 = vperm.slane %v82, 0
    %v116 = vunpack.c.l.b16 %v83
    %v117 = vunpack.c.l.b16 %v84
    %v118 = vunpack.c.l.b16 %v85
    %v119 = vunpack.c.l.b16 %v86
    %v120 = vunpack.c.l.b16 %v87
    %v121 = vunpack.c.l.b16 %v88
    %v122 = vunpack.c.l.b16 %v89
    %v123 = vunpack.c.l.b16 %v90
    %v124 = vunpack.c.l.b16 %v91
    %v125 = vunpack.c.l.b16 %v92
    %v126 = vunpack.c.l.b16 %v93
    %v127 = vunpack.c.l.b16 %v94
    %v128 = vunpack.c.l.b16 %v95
    %v129 = vunpack.c.l.b16 %v96
    %v130 = vunpack.c.l.b16 %v97
    %v131 = vunpack.c.l.b16 %v98
    %v132 = vpack.c.b16 %v117, %v116
    %v133 = vpack.c.b16 %v119, %v118
    %v134 = vpack.c.b16 %v121, %v120
    %v135 = vpack.c.b16 %v123, %v122
    %v136 = vpack.c.b16 %v125, %v124
    %v137 = vpack.c.b16 %v127, %v126
    %v138 = vpack.c.b16 %v129, %v128
    %v139 = vpack.c.b16 %v131, %v130
    %148 = vmatpush.bf16.msra.mxu0 %v139
    %149 = vmatpush.bf16.msra.mxu0 %v138
    %150 = vmatpush.bf16.msra.mxu0 %v137
    %151 = vmatpush.bf16.msra.mxu0 %v136
    %152 = vmatpush.bf16.msra.mxu0 %v135
    %153 = vmatpush.bf16.msra.mxu0 %v134
    %154 = vmatpush.bf16.msra.mxu0 %v133
    %155 = vmatpush.bf16.msra.mxu0 %v132
    %156 = vmatmul.bf16.gmra.mxu0 %v81
    %v157 = vpop.f32.mrf.mxu0
    %v158 = vadd.f32 %v99, %v157
    %v159 = vpop.f32.mrf.mxu0
    %v160 = vadd.f32 %v99, %v159
    %161 = vdwg.mxu0
    %v162 = vmax.f32 %v158, 0.0
    %v163 = vmax.f32 %v160, 0.0
    %v164 = vpack.c.bf16 %v163, %v162
    %v165 = vld [vmem:[#allocation7] sm:$0xf]
    %v166 = vld [vmem:[#allocation7 + $0x4] sm:$0xf]
    %v167 = vld [vmem:[#allocation7 + $0x8] sm:$0xf]
    %v168 = vld [vmem:[#allocation7 + $0xc] sm:$0xf]
    %v169 = vld [vmem:[#allocation7 + $0x10] sm:$0xf]
    %v170 = vld [vmem:[#allocation7 + $0x14] sm:$0xf]
    %v171 = vld [vmem:[#allocation7 + $0x18] sm:$0xf]
    %v172 = vld [vmem:[#allocation7 + $0x1c] sm:$0xf]
    %v173 = vld [vmem:[#allocation7 + $0x20] sm:$0xf]
    %v174 = vld [vmem:[#allocation7 + $0x24] sm:$0xf]
    %v175 = vld [vmem:[#allocation7 + $0x28] sm:$0xf]
    %v176 = vld [vmem:[#allocation7 + $0x2c] sm:$0xf]
    %v177 = vld [vmem:[#allocation7 + $0x30] sm:$0xf]
    %v178 = vld [vmem:[#allocation7 + $0x34] sm:$0xf]
    %v179 = vld [vmem:[#allocation7 + $0x38] sm:$0xf]
    %v180 = vld [vmem:[#allocation7 + $0x3c] sm:$0xf]
    %v181 = vperm.slane %v82, 1
    %v198 = vunpack.c.l.b16 %v165
    %v199 = vunpack.c.l.b16 %v166
    %v200 = vunpack.c.l.b16 %v167
    %v201 = vunpack.c.l.b16 %v168
    %v202 = vunpack.c.l.b16 %v169
    %v203 = vunpack.c.l.b16 %v170
    %v204 = vunpack.c.l.b16 %v171
    %v205 = vunpack.c.l.b16 %v172
    %v206 = vunpack.c.l.b16 %v173
    %v207 = vunpack.c.l.b16 %v174
    %v208 = vunpack.c.l.b16 %v175
    %v209 = vunpack.c.l.b16 %v176
    %v210 = vunpack.c.l.b16 %v177
    %v211 = vunpack.c.l.b16 %v178
    %v212 = vunpack.c.l.b16 %v179
    %v213 = vunpack.c.l.b16 %v180
    %v214 = vpack.c.b16 %v199, %v198
    %v215 = vpack.c.b16 %v201, %v200
    %v216 = vpack.c.b16 %v203, %v202
    %v217 = vpack.c.b16 %v205, %v204
    %v218 = vpack.c.b16 %v207, %v206
    %v219 = vpack.c.b16 %v209, %v208
    %v220 = vpack.c.b16 %v211, %v210
    %v221 = vpack.c.b16 %v213, %v212
    %230 = vmatpush.bf16.msra.mxu0 %v221
    %231 = vmatpush.bf16.msra.mxu0 %v220
    %232 = vmatpush.bf16.msra.mxu0 %v219
    %233 = vmatpush.bf16.msra.mxu0 %v218
    %234 = vmatpush.bf16.msra.mxu0 %v217
    %235 = vmatpush.bf16.msra.mxu0 %v216
    %236 = vmatpush.bf16.msra.mxu0 %v215
    %237 = vmatpush.bf16.msra.mxu0 %v214
    %238 = vmatmul.bf16.gmra.mxu0 %v164
    %v239 = vpop.f32.mrf.mxu0
    %v240 = vadd.f32 %v181, %v239
    %v241 = vpop.f32.mrf.mxu0
    %v242 = vadd.f32 %v181, %v241
    %243 = vdwg.mxu0
    %v244 = vadd.f32 %v79, %v240
    %v245 = vadd.f32 %v80, %v242
    %246 = vadd.xlane.f32.xlu0 %v244
    %v247 = vpop.xlane.xlu0 %246
    %248 = vadd.xlane.f32.xlu0 %v245
    %v249 = vpop.xlane.xlu0 %248
    %v250 = vrcp.pop 128.0
    %v251 = vmul.f32 128.0, %v250
    %v252 = vsub.f32 1.0, %v251
    %v253 = vmul.f32 %v250, %v252
    %v254 = vadd.f32 %v250, %v253
    %vm255 = vweird.f32 %v250
    %v256 = vsel %vm255, %v250, %v254
    %v257 = vmul.f32 %v247, %v256
    %v258 = vmul.f32 %v249, %v256
    %v259 = vsub.f32 %v244, %v257
    %v260 = vsub.f32 %v245, %v258
    %v261 = vmul.f32 %v259, %v259
    %v262 = vmul.f32 %v260, %v260
    %263 = vadd.xlane.f32.xlu0 %v261
    %v264 = vpop.xlane.xlu0 %263
    %265 = vadd.xlane.f32.xlu0 %v262
    %v266 = vpop.xlane.xlu0 %265
    %v267 = vmul.f32 %v264, %v256
    %v268 = vmul.f32 %v266, %v256
    %v269 = vadd.f32 %v267, 1e-05
    %v270 = vadd.f32 %v268, 1e-05
    %v271 = vrsqrt.pop %v269
    %v272 = vmul.f32 %v271, %v269
    %v273 = vmul.f32 %v272, %v271
    %v274 = vmul.f32 0.5, %v273
    %v275 = vsub.f32 1.5, %v274
    %v276 = vmul.f32 %v271, %v275
    %vm277 = vweird.f32 %v269
    %vm278 = vweird.f32 %v271
    %vm279 = vmor %vm277, %vm278
    %v280 = vsel %vm279, %v271, %v276
    %v281 = vrsqrt.pop %v270
    %v282 = vmul.f32 %v281, %v270
    %v283 = vmul.f32 %v282, %v281
    %v284 = vmul.f32 0.5, %v283
    %v285 = vsub.f32 1.5, %v284
    %v286 = vmul.f32 %v281, %v285
    %vm287 = vweird.f32 %v270
    %vm288 = vweird.f32 %v281
    %vm289 = vmor %vm287, %vm288
    %v290 = vsel %vm289, %v281, %v286
    %v291 = vmul.f32 %v259, %v280
    %v292 = vmul.f32 %v260, %v290
    %v293 = vperm.slane %v82, 2
    %v294 = vmul.f32 %v291, %v293
    %v295 = vmul.f32 %v292, %v293
    %v296 = vperm.slane %v82, 3
    %v297 = vadd.f32 %v294, %v296
    %v298 = vadd.f32 %v295, %v296
    %299 = vst [vmem:[#allocation10] sm:$0xff] %v297
    %300 = vst [vmem:[#allocation10 + $0x8] sm:$0xff] %v298
    // Predicated region
    $region34: #{tpu_custom_call.1} parent=1 // pred_check
      _
    $region35: #{tpu_custom_call.1} parent=1 // pred_check_branch
      %302 = sbr.rel (0) target = $region37
    $region36: #{tpu_custom_call.1} parent=1 // pred_region
      %304 = vsyncadd [#allocation4], 0
      %s305 = sshll.u32 [#allocation10], 4
      %s306 = int_to_ptr.vmem [resolvable:$true] %s305
      %s307 = sshll.u32 %s4, 4
      %s308 = int_to_ptr.hbm [resolvable:$true] %s307
      %313 = dma.vmem_to_hbm [thread:$0]  %s306, 256, %s308, [#allocation4], 128, 128, 8
    $region37: #{tpu_custom_call.1} parent=1 // pred_fallthru
      _
    // Predicated region
    $region38: #{tpu_custom_call.1} parent=1 // pred_check
      _
    $region39: #{tpu_custom_call.1} parent=1 // pred_check_branch
      %315 = sbr.rel (0) target = $region41
    $region40: #{tpu_custom_call.1} parent=1 // pred_region
      %317 = dma.done [#allocation4], 256
    $region41: #{tpu_custom_call.1} parent=1 // pred_fallthru
      _
    %318 = vsyncpa [#allocation3], 1
    %319 = vsyncpa [#allocation6], 1
    %320 = vsyncpa [#allocation9], 1
    %321 = vsyncpa [#allocation4], 1

</llo_original>
